<compile_context>
chip_gen: v5e
topology: v5e:2x2
jax: 0.10.0
libtpu: 0.0.40
codegen_flags: <defaults>
</compile_context>

<pallas_src>
import functools

import jax
import jax.numpy as jnp
from jax.experimental import pallas as pl
from jax.experimental.pallas import tpu as pltpu

_LANE = 128            # lane width (last-dim tile)
_SUBLANE = 8           # f32 sublane tile
_MAX_BATCH_TILE = 256  # rows per grid step once the batch gets large


def _round_up(x, m):
    return (x + m - 1) // m * m


def mlp_kernel(inp_ref, w_in_ref, b_in_ref, w_x_ref, w_inp_ref, b_h_ref,
               w_out_ref, b_out_ref, out_ref, *, num_hidden_layers, hidden_p):
    """One batch tile of the dense-connection MLP, fully resident in VMEM.

    inp_ref:   (Bt, I_p)      f32   zero-padded input rows/cols
    w_in_ref:  (I_p, H_p)     bf16  linear_in weight, pre-transposed
    b_in_ref:  (1, H_p)       f32
    w_x_ref:   (L, H_p, H_p)  bf16  x-part of each hidden layer, pre-transposed
    w_inp_ref: (I_p, L*H_p)   bf16  stacked inp-part of all hidden layers
    b_h_ref:   (L, H_p)       f32
    w_out_ref: (H_p, O_p)     bf16  linear_out weight, pre-transposed
    b_out_ref: (1, O_p)       f32
    out_ref:   (Bt, O_p)      f32   lane-dense output (O_p % 128 == 0)
    """
    inp_bf = inp_ref[...].astype(jnp.bfloat16)

    # x = relu(inp @ W_in^T + b_in)   -- weights pre-transposed, no .T here.
    x = jnp.dot(inp_bf, w_in_ref[...], preferred_element_type=jnp.float32)
    x = jnp.maximum(x + b_in_ref[...], 0.0)

    # Hoisted input contribution of every hidden layer: one wide GEMM replaces
    # the per-layer lane-axis concat([x, inp]) of the original module.
    inp_proj = jnp.dot(inp_bf, w_inp_ref[...],
                       preferred_element_type=jnp.float32)

    b_h = b_h_ref[...]
    # num_hidden_layers is small (3) so a static unroll is fine; for large L
    # switch to lax.fori_loop (with pl.ds indexing) or a grid axis over layers.
    for i in range(num_hidden_layers):
        h = jnp.dot(x.astype(jnp.bfloat16), w_x_ref[i],
                    preferred_element_type=jnp.float32)
        h = h + inp_proj[:, i * hidden_p:(i + 1) * hidden_p]  # 128-aligned slice
        x = jnp.maximum(h + b_h[i:i + 1, :], 0.0)

    out = jnp.dot(x.astype(jnp.bfloat16), w_out_ref[...],
                  preferred_element_type=jnp.float32)
    out_ref[...] = (out + b_out_ref[...]).astype(out_ref.dtype)


def prepare_params(params):
    """nn.Linear-layout params -> kernel layout (transpose / split / pad / bf16).

    Pure layout plumbing done once outside the kernel (free wrapper-side work).
    """
    w_in, b_in, w_h, b_h, w_out, b_out = params
    hidden, inp_sz = w_in.shape
    out_sz = w_out.shape[0]
    num_layers = w_h.shape[0]

    h_p = _round_up(hidden, _LANE)
    i_p = _round_up(inp_sz, _SUBLANE)
    o_p = _round_up(out_sz, _LANE)

    def pad2(a, shape, dtype):
        return (jnp.zeros(shape, jnp.float32)
                .at[:a.shape[0], :a.shape[1]].set(a.astype(jnp.float32))
                .astype(dtype))

    w_in_t = pad2(w_in.T, (i_p, h_p), jnp.bfloat16)
    b_in_p = pad2(b_in.reshape(1, -1), (1, h_p), jnp.float32)

    # Hidden weights act on concat([x, inp]): first `hidden` columns multiply
    # x, the remaining `inp_sz` columns multiply the original input.
    w_x = jnp.transpose(w_h[:, :, :hidden], (0, 2, 1))   # (L, hidden, hidden)
    w_i = jnp.transpose(w_h[:, :, hidden:], (0, 2, 1))   # (L, inp_sz, hidden)

    w_x_t = (jnp.zeros((num_layers, h_p, h_p), jnp.float32)
             .at[:, :hidden, :hidden].set(w_x)
             .astype(jnp.bfloat16))
    w_i_t = (jnp.zeros((num_layers, i_p, h_p), jnp.float32)
             .at[:, :inp_sz, :hidden].set(w_i))
    # Stack inp-parts of all layers: layer l -> columns [l*H_p, (l+1)*H_p).
    w_inp_all = (jnp.transpose(w_i_t, (1, 0, 2))
                 .reshape(i_p, num_layers * h_p)
                 .astype(jnp.bfloat16))
    b_h_p = pad2(b_h, (num_layers, h_p), jnp.float32)

    w_out_t = pad2(w_out.T, (h_p, o_p), jnp.bfloat16)
    b_out_p = pad2(b_out.reshape(1, -1), (1, o_p), jnp.float32)

    prepped = (w_in_t, b_in_p, w_x_t, w_inp_all, b_h_p, w_out_t, b_out_p)
    return prepped, (i_p, h_p, o_p)


def _resident_vmem_spec(arr):
    """Full-array block + constant index map: stays resident across the grid."""
    zeros = (0,) * arr.ndim
    return pl.BlockSpec(arr.shape, lambda b: zeros,
                        memory_space=pltpu.MemorySpace.VMEM)


def mlp_forward(inp, params, *, num_hidden_layers):
    batch, inp_sz = inp.shape
    out_sz = params[4].shape[0]   # w_out: (output, hidden)

    prepped, (i_p, h_p, o_p) = prepare_params(params)

    # Pad batch to a sublane multiple; tile it over a "parallel" grid so large
    # batches shard across TensorCores and launch overhead is amortized.
    b_p = _round_up(batch, _SUBLANE)
    if b_p > _MAX_BATCH_TILE:
        batch_tile = _MAX_BATCH_TILE
        b_p = _round_up(b_p, batch_tile)
    else:
        batch_tile = b_p
    grid = (b_p // batch_tile,)

    inp_p = (jnp.zeros((b_p, i_p), jnp.float32)
             .at[:batch, :inp_sz].set(inp.astype(jnp.float32)))

    kernel = functools.partial(mlp_kernel,
                               num_hidden_layers=num_hidden_layers,
                               hidden_p=h_p)

    in_specs = [pl.BlockSpec((batch_tile, i_p), lambda b: (b, 0),
                             memory_space=pltpu.MemorySpace.VMEM)]
    in_specs += [_resident_vmem_spec(a) for a in prepped]
    out_specs = pl.BlockSpec((batch_tile, o_p), lambda b: (b, 0),
                             memory_space=pltpu.MemorySpace.VMEM)

    # Size scoped VMEM to the actual operands (never below the 16 MiB default)
    # so scale-ups don't hit the default limit silently.
    operand_bytes = inp_p.size * inp_p.dtype.itemsize
    operand_bytes += sum(a.size * a.dtype.itemsize for a in prepped)
    operand_bytes += b_p * o_p * 4
    vmem_limit = max(16 * 1024 * 1024, 2 * int(operand_bytes) + (2 << 20))

    out_p = pl.pallas_call(
        kernel,
        out_shape=jax.ShapeDtypeStruct((b_p, o_p), jnp.float32),
        grid=grid,
        in_specs=in_specs,
        out_specs=out_specs,
        compiler_params=pltpu.CompilerParams(
            dimension_semantics=("parallel",),
            vmem_limit_bytes=vmem_limit),
    )(inp_p, *prepped)

    return out_p[:batch, :out_sz]


def init_params(key, input_size, output_size, hidden_size, num_hidden_layers):
    """Deterministic init matching nn.Linear's U(-1/sqrt(fan_in), 1/sqrt(fan_in))."""
    hidden_aug = hidden_size + input_size
    ks = jax.random.split(key, 6)

    def uni(k, shape, fan_in):
        bound = 1.0 / jnp.sqrt(jnp.float32(fan_in))
        return jax.random.uniform(k, shape, jnp.float32, -bound, bound)

    w_in = uni(ks[0], (hidden_size, input_size), input_size)
    b_in = uni(ks[1], (1, hidden_size), input_size)
    w_h = uni(ks[2], (num_hidden_layers, hidden_size, hidden_aug), hidden_aug)
    b_h = uni(ks[3], (num_hidden_layers, hidden_size), hidden_aug)
    w_out = uni(ks[4], (output_size, hidden_size), hidden_size)
    b_out = uni(ks[5], (1, output_size), hidden_size)
    return w_in, b_in, w_h, b_h, w_out, b_out


def mlp_reference(inp, params, *, num_hidden_layers, bf16_matmul=True):
    """Pure-JAX replica of the PyTorch forward; optionally uses the same
    bf16-operand / f32-accumulate matmul policy as the kernel."""
    w_in, b_in, w_h, b_h, w_out, b_out = params

    def mm(a, w):
        if bf16_matmul:
            a = a.astype(jnp.bfloat16)
            w = w.astype(jnp.bfloat16)
        return jnp.dot(a, w.T, preferred_element_type=jnp.float32)

    x = jax.nn.relu(mm(inp, w_in) + b_in)
    for i in range(num_hidden_layers):
        x_aug = jnp.concatenate([x, inp], axis=1)
        x = jax.nn.relu(mm(x_aug, w_h[i]) + b_h[i:i + 1, :])
    return mm(x, w_out) + b_out


if __name__ == "__main__":
    input_size, output_size, hidden_size = 16, 8, 32
    num_hidden_layers = 3
    batch = 4

    key = jax.random.PRNGKey(0)
    k_inp, k_par = jax.random.split(key)
    inp = jax.random.normal(k_inp, (batch, input_size), jnp.float32)
    params = init_params(k_par, input_size, output_size, hidden_size,
                         num_hidden_layers)

    out = mlp_forward(inp, params, num_hidden_layers=num_hidden_layers)
    out = jax.block_until_ready(out)
    assert out.shape == (batch, output_size)

    # Tight check vs. a reference using the same bf16-matmul / f32-accumulate policy.
    ref_bf16 = mlp_reference(inp, params, num_hidden_layers=num_hidden_layers,
                             bf16_matmul=True)
    assert jnp.allclose(out, ref_bf16, atol=1e-2, rtol=1e-2), "mismatch vs bf16 reference"

    # Sanity check vs. the full-f32 PyTorch-equivalent forward.
    ref_f32 = mlp_reference(inp, params, num_hidden_layers=num_hidden_layers,
                            bf16_matmul=False)
    assert jnp.allclose(out, ref_f32, atol=1e-1, rtol=1e-1), "mismatch vs f32 reference"

    print("KERNEL_OK")
</pallas_src>

<mosaic_0001>
module attributes {stable_mosaic.version = 11 : i64} {
  func.func @mlp_kernel(%arg0: i32, %arg1: memref<8x16xf32, #tpu.memory_space<vmem>>, %arg2: memref<16x128xbf16, #tpu.memory_space<vmem>>, %arg3: memref<1x128xf32, #tpu.memory_space<vmem>>, %arg4: memref<3x128x128xbf16, #tpu.memory_space<vmem>>, %arg5: memref<16x384xbf16, #tpu.memory_space<vmem>>, %arg6: memref<3x128xf32, #tpu.memory_space<vmem>>, %arg7: memref<128x128xbf16, #tpu.memory_space<vmem>>, %arg8: memref<1x128xf32, #tpu.memory_space<vmem>>, %arg9: memref<8x128xf32, #tpu.memory_space<vmem>>) attributes {dimension_semantics = [#tpu.dimension_semantics<parallel>], iteration_bounds = array<i64: 1>, scalar_prefetch = 0 : i64, scratch_operands = 0 : i64, tpu.core_type = #tpu.core_type<tc>, window_params = [{transform_indices = @transform_0, window_bounds = array<i64: 8, 16>}, {pipeline_mode = #tpu.pipeline_mode<synchronous>, transform_indices = @transform_1, window_bounds = array<i64: 16, 128>}, {pipeline_mode = #tpu.pipeline_mode<synchronous>, transform_indices = @transform_2, window_bounds = array<i64: 1, 128>}, {pipeline_mode = #tpu.pipeline_mode<synchronous>, transform_indices = @transform_3, window_bounds = array<i64: 3, 128, 128>}, {pipeline_mode = #tpu.pipeline_mode<synchronous>, transform_indices = @transform_4, window_bounds = array<i64: 16, 384>}, {pipeline_mode = #tpu.pipeline_mode<synchronous>, transform_indices = @transform_5, window_bounds = array<i64: 3, 128>}, {pipeline_mode = #tpu.pipeline_mode<synchronous>, transform_indices = @transform_6, window_bounds = array<i64: 128, 128>}, {pipeline_mode = #tpu.pipeline_mode<synchronous>, transform_indices = @transform_7, window_bounds = array<i64: 1, 128>}, {transform_indices = @transform_8, window_bounds = array<i64: 8, 128>}]} {
    %c0 = arith.constant 0 : index
    %c0_0 = arith.constant 0 : index
    %0 = vector.load %arg1[%c0, %c0_0] : memref<8x16xf32, #tpu.memory_space<vmem>>, vector<8x16xf32>
    %1 = arith.truncf %0 : vector<8x16xf32> to vector<8x16xbf16>
    %c0_1 = arith.constant 0 : index
    %c0_2 = arith.constant 0 : index
    %2 = vector.load %arg2[%c0_1, %c0_2] : memref<16x128xbf16, #tpu.memory_space<vmem>>, vector<16x128xbf16>
    %cst = arith.constant dense<0.000000e+00> : vector<8x128xf32>
    %3 = tpu.matmul %1, %2, %cst {dimension_numbers = #tpu.dot_dimension_numbers<[1], [0], [0], [1], [0, 0, 1, 1], [], []>} : vector<8x16xbf16>, vector<16x128xbf16>, vector<8x128xf32> -> vector<8x128xf32>
    %c0_3 = arith.constant 0 : index
    %c0_4 = arith.constant 0 : index
    %4 = vector.load %arg3[%c0_3, %c0_4] : memref<1x128xf32, #tpu.memory_space<vmem>>, vector<1x128xf32>
    %5 = vector.broadcast %4 : vector<1x128xf32> to vector<8x128xf32>
    %6 = arith.addf %3, %5 : vector<8x128xf32>
    %cst_5 = arith.constant 0.000000e+00 : f32
    %7 = vector.broadcast %cst_5 : f32 to vector<8x128xf32>
    %8 = arith.maximumf %6, %7 : vector<8x128xf32>
    %c0_6 = arith.constant 0 : index
    %c0_7 = arith.constant 0 : index
    %9 = vector.load %arg5[%c0_6, %c0_7] : memref<16x384xbf16, #tpu.memory_space<vmem>>, vector<16x384xbf16>
    %cst_8 = arith.constant dense<0.000000e+00> : vector<8x384xf32>
    %10 = tpu.matmul %1, %9, %cst_8 {dimension_numbers = #tpu.dot_dimension_numbers<[1], [0], [0], [1], [0, 0, 1, 1], [], []>} : vector<8x16xbf16>, vector<16x384xbf16>, vector<8x384xf32> -> vector<8x384xf32>
    %c0_9 = arith.constant 0 : index
    %c0_10 = arith.constant 0 : index
    %11 = vector.load %arg6[%c0_9, %c0_10] : memref<3x128xf32, #tpu.memory_space<vmem>>, vector<3x128xf32>
    %12 = arith.truncf %8 : vector<8x128xf32> to vector<8x128xbf16>
    %c0_11 = arith.constant 0 : index
    %c0_12 = arith.constant 0 : index
    %c0_13 = arith.constant 0 : index
    %13 = vector.load %arg4[%c0_11, %c0_12, %c0_13] : memref<3x128x128xbf16, #tpu.memory_space<vmem>>, vector<1x128x128xbf16>
    %14 = vector.shape_cast %13 : vector<1x128x128xbf16> to vector<128x128xbf16>
    %cst_14 = arith.constant dense<0.000000e+00> : vector<8x128xf32>
    %15 = tpu.matmul %12, %14, %cst_14 {dimension_numbers = #tpu.dot_dimension_numbers<[1], [0], [0], [1], [0, 0, 1, 1], [], []>} : vector<8x128xbf16>, vector<128x128xbf16>, vector<8x128xf32> -> vector<8x128xf32>
    %16 = vector.extract_strided_slice %10 {offsets = [0, 0], sizes = [8, 128], strides = [1, 1]} : vector<8x384xf32> to vector<8x128xf32>
    %17 = arith.addf %15, %16 : vector<8x128xf32>
    %18 = vector.extract_strided_slice %11 {offsets = [0, 0], sizes = [1, 128], strides = [1, 1]} : vector<3x128xf32> to vector<1x128xf32>
    %19 = vector.broadcast %18 : vector<1x128xf32> to vector<8x128xf32>
    %20 = arith.addf %17, %19 : vector<8x128xf32>
    %cst_15 = arith.constant 0.000000e+00 : f32
    %21 = vector.broadcast %cst_15 : f32 to vector<8x128xf32>
    %22 = arith.maximumf %20, %21 : vector<8x128xf32>
    %23 = arith.truncf %22 : vector<8x128xf32> to vector<8x128xbf16>
    %c1 = arith.constant 1 : index
    %c0_16 = arith.constant 0 : index
    %c0_17 = arith.constant 0 : index
    %24 = vector.load %arg4[%c1, %c0_16, %c0_17] : memref<3x128x128xbf16, #tpu.memory_space<vmem>>, vector<1x128x128xbf16>
    %25 = vector.shape_cast %24 : vector<1x128x128xbf16> to vector<128x128xbf16>
    %cst_18 = arith.constant dense<0.000000e+00> : vector<8x128xf32>
    %26 = tpu.matmul %23, %25, %cst_18 {dimension_numbers = #tpu.dot_dimension_numbers<[1], [0], [0], [1], [0, 0, 1, 1], [], []>} : vector<8x128xbf16>, vector<128x128xbf16>, vector<8x128xf32> -> vector<8x128xf32>
    %27 = vector.extract_strided_slice %10 {offsets = [0, 128], sizes = [8, 128], strides = [1, 1]} : vector<8x384xf32> to vector<8x128xf32>
    %28 = arith.addf %26, %27 : vector<8x128xf32>
    %29 = vector.extract_strided_slice %11 {offsets = [1, 0], sizes = [1, 128], strides = [1, 1]} : vector<3x128xf32> to vector<1x128xf32>
    %30 = vector.broadcast %29 : vector<1x128xf32> to vector<8x128xf32>
    %31 = arith.addf %28, %30 : vector<8x128xf32>
    %cst_19 = arith.constant 0.000000e+00 : f32
    %32 = vector.broadcast %cst_19 : f32 to vector<8x128xf32>
    %33 = arith.maximumf %31, %32 : vector<8x128xf32>
    %34 = arith.truncf %33 : vector<8x128xf32> to vector<8x128xbf16>
    %c2 = arith.constant 2 : index
    %c0_20 = arith.constant 0 : index
    %c0_21 = arith.constant 0 : index
    %35 = vector.load %arg4[%c2, %c0_20, %c0_21] : memref<3x128x128xbf16, #tpu.memory_space<vmem>>, vector<1x128x128xbf16>
    %36 = vector.shape_cast %35 : vector<1x128x128xbf16> to vector<128x128xbf16>
    %cst_22 = arith.constant dense<0.000000e+00> : vector<8x128xf32>
    %37 = tpu.matmul %34, %36, %cst_22 {dimension_numbers = #tpu.dot_dimension_numbers<[1], [0], [0], [1], [0, 0, 1, 1], [], []>} : vector<8x128xbf16>, vector<128x128xbf16>, vector<8x128xf32> -> vector<8x128xf32>
    %38 = vector.extract_strided_slice %10 {offsets = [0, 256], sizes = [8, 128], strides = [1, 1]} : vector<8x384xf32> to vector<8x128xf32>
    %39 = arith.addf %37, %38 : vector<8x128xf32>
    %40 = vector.extract_strided_slice %11 {offsets = [2, 0], sizes = [1, 128], strides = [1, 1]} : vector<3x128xf32> to vector<1x128xf32>
    %41 = vector.broadcast %40 : vector<1x128xf32> to vector<8x128xf32>
    %42 = arith.addf %39, %41 : vector<8x128xf32>
    %cst_23 = arith.constant 0.000000e+00 : f32
    %43 = vector.broadcast %cst_23 : f32 to vector<8x128xf32>
    %44 = arith.maximumf %42, %43 : vector<8x128xf32>
    %45 = arith.truncf %44 : vector<8x128xf32> to vector<8x128xbf16>
    %c0_24 = arith.constant 0 : index
    %c0_25 = arith.constant 0 : index
    %46 = vector.load %arg7[%c0_24, %c0_25] : memref<128x128xbf16, #tpu.memory_space<vmem>>, vector<128x128xbf16>
    %cst_26 = arith.constant dense<0.000000e+00> : vector<8x128xf32>
    %47 = tpu.matmul %45, %46, %cst_26 {dimension_numbers = #tpu.dot_dimension_numbers<[1], [0], [0], [1], [0, 0, 1, 1], [], []>} : vector<8x128xbf16>, vector<128x128xbf16>, vector<8x128xf32> -> vector<8x128xf32>
    %c0_27 = arith.constant 0 : index
    %c0_28 = arith.constant 0 : index
    %48 = vector.load %arg8[%c0_27, %c0_28] : memref<1x128xf32, #tpu.memory_space<vmem>>, vector<1x128xf32>
    %49 = vector.broadcast %48 : vector<1x128xf32> to vector<8x128xf32>
    %50 = arith.addf %47, %49 : vector<8x128xf32>
    %c0_29 = arith.constant 0 : index
    %c0_30 = arith.constant 0 : index
    %51 = vector.load %arg9[%c0_29, %c0_30] : memref<8x128xf32, #tpu.memory_space<vmem>>, vector<8x128xf32>
    tpu.vector_store %arg9[%c0_29, %c0_30], %50 {strides = array<i32>} : memref<8x128xf32, #tpu.memory_space<vmem>>, vector<8x128xf32>,
    return
  }
  func.func @transform_0(%arg0: i32) -> (i32, i32) {
    %c0_i32 = arith.constant 0 : i32
    %c0_i32_0 = arith.constant 0 : i32
    return %arg0, %c0_i32 : i32, i32
  }
  func.func @transform_1(%arg0: i32) -> (i32, i32) {
    %c0_i32 = arith.constant 0 : i32
    %c0_i32_0 = arith.constant 0 : i32
    %c0_i32_1 = arith.constant 0 : i32
    return %c0_i32, %c0_i32_0 : i32, i32
  }
  func.func @transform_2(%arg0: i32) -> (i32, i32) {
    %c0_i32 = arith.constant 0 : i32
    %c0_i32_0 = arith.constant 0 : i32
    %c0_i32_1 = arith.constant 0 : i32
    return %c0_i32, %c0_i32_0 : i32, i32
  }
  func.func @transform_3(%arg0: i32) -> (i32, i32, i32) {
    %c0_i32 = arith.constant 0 : i32
    %c0_i32_0 = arith.constant 0 : i32
    %c0_i32_1 = arith.constant 0 : i32
    %c0_i32_2 = arith.constant 0 : i32
    return %c0_i32, %c0_i32_0, %c0_i32_1 : i32, i32, i32
  }
  func.func @transform_4(%arg0: i32) -> (i32, i32) {
    %c0_i32 = arith.constant 0 : i32
    %c0_i32_0 = arith.constant 0 : i32
    %c0_i32_1 = arith.constant 0 : i32
    return %c0_i32, %c0_i32_0 : i32, i32
  }
  func.func @transform_5(%arg0: i32) -> (i32, i32) {
    %c0_i32 = arith.constant 0 : i32
    %c0_i32_0 = arith.constant 0 : i32
    %c0_i32_1 = arith.constant 0 : i32
    return %c0_i32, %c0_i32_0 : i32, i32
  }
  func.func @transform_6(%arg0: i32) -> (i32, i32) {
    %c0_i32 = arith.constant 0 : i32
    %c0_i32_0 = arith.constant 0 : i32
    %c0_i32_1 = arith.constant 0 : i32
    return %c0_i32, %c0_i32_0 : i32, i32
  }
  func.func @transform_7(%arg0: i32) -> (i32, i32) {
    %c0_i32 = arith.constant 0 : i32
    %c0_i32_0 = arith.constant 0 : i32
    %c0_i32_1 = arith.constant 0 : i32
    return %c0_i32, %c0_i32_0 : i32, i32
  }
  func.func @transform_8(%arg0: i32) -> (i32, i32) {
    %c0_i32 = arith.constant 0 : i32
    %c0_i32_0 = arith.constant 0 : i32
    return %arg0, %c0_i32 : i32, i32
  }
}

</mosaic_0001>

<llo_original>
// kernel: tpu_custom_call.1
$region0: #{tpu_custom_call.1}
  #allocation0 [shape = 'u32[]', space=smem, size = 0x4, offset = 0x4, fixed_abs, tag = 'smem constant byte address 0x4 - core index']
  #allocation1 [shape = 'u32[72,128]{1,0:T(1,128)}', space=vmem, size = 0x9000, scoped, tag = 'internal scratch']
  %s0 = inlined_call_operand.hbm [shape: f32[8,16], index: 0, kind: input, shape index: {}]
  %s1 = inlined_call_operand.hbm [shape: bf16[16,128], index: 1, kind: input, shape index: {}]
  %s2 = inlined_call_operand.hbm [shape: f32[1,128], index: 2, kind: input, shape index: {}]
  %s3 = inlined_call_operand.hbm [shape: bf16[3,128,128], index: 3, kind: input, shape index: {}]
  %s4 = inlined_call_operand.hbm [shape: bf16[16,384], index: 4, kind: input, shape index: {}]
  %s5 = inlined_call_operand.vmem [shape: f32[3,128], index: 5, kind: input, shape index: {}]
  %s6 = inlined_call_operand.hbm [shape: bf16[128,128], index: 6, kind: input, shape index: {}]
  %s7 = inlined_call_operand.vmem [shape: f32[1,128], index: 7, kind: input, shape index: {}]
  %s8 = inlined_call_operand.hbm [shape: f32[8,128], index: 8, kind: output, shape index: {}]
  %s9 = sld [smem:[#allocation0]]
  $region66: #{tpu_custom_call.1} parent=0
    _
  %s11 = ssub.s32 1, %s9
  %s12 = scalar_select 0, %s11, %s9
  $region1: #{tpu_custom_call.1} parent=0
    #allocation2 [shape = 'u8[4096]{0}', space=vmem, size = 0x1000, scoped, tag = 'input window, operand 0, single buffered']
    #allocation3 [shape = 's32[1]{0}', space=sflag, size = 0x4, scoped, tag = 'scoped memory for tpu_custom_call.1']
    #allocation4 [shape = 's32[1]{0}', space=sflag, size = 0x4, scoped, tag = 'scoped memory for tpu_custom_call.1']
    #allocation5 [shape = 'u8[4096]{0}', space=vmem, size = 0x1000, scoped, tag = 'input window, operand 1, single buffered']
    #allocation6 [shape = 's32[1]{0}', space=sflag, size = 0x4, scoped, tag = 'scoped memory for tpu_custom_call.1']
    #allocation7 [shape = 'u8[512]{0}', space=vmem, size = 0x400, scoped, tag = 'input window, operand 2, single buffered']
    #allocation8 [shape = 'u8[98304]{0}', space=vmem, size = 0x18000, scoped, tag = 'input window, operand 3, single buffered']
    #allocation9 [shape = 's32[1]{0}', space=sflag, size = 0x4, scoped, tag = 'scoped memory for tpu_custom_call.1']
    #allocation10 [shape = 'u8[12288]{0}', space=vmem, size = 0x3000, scoped, tag = 'input window, operand 4, single buffered']
    #allocation11 [shape = 'u8[32768]{0}', space=vmem, size = 0x8000, scoped, tag = 'input window, operand 6, single buffered']
    #allocation12 [shape = 's32[1]{0}', space=sflag, size = 0x4, scoped, tag = 'scoped memory for tpu_custom_call.1']
    #allocation13 [shape = 'u8[4096]{0}', space=vmem, size = 0x1000, scoped, tag = 'output window, operand 0, single buffered']
    %13 = vsyncpa [#allocation3], 0
    %14 = vsyncpa [#allocation6], 0
    %15 = vsyncpa [#allocation9], 0
    %16 = vsyncpa [#allocation12], 0
    %17 = vsyncpa [#allocation4], 0
    // Predicated region
    $region2: #{tpu_custom_call.1} parent=1 // pred_check
      _
    $region3: #{tpu_custom_call.1} parent=1 // pred_check_branch
      %19 = sbr.rel (0) target = $region5
    $region4: #{tpu_custom_call.1} parent=1 // pred_region
      %21 = vsyncadd [#allocation3], 0
      %s23 = sshll.u32 %s0, 4
      %s24 = int_to_ptr.hbm [resolvable:$true] %s23
      %s25 = sshll.u32 [#allocation2], 4
      %s26 = int_to_ptr.vmem [resolvable:$true] %s25
      %28 = dma.hbm_to_vmem [thread:$0]  %s24, 128, %s26, [#allocation3]
    $region5: #{tpu_custom_call.1} parent=1 // pred_fallthru
      _
    // Predicated region
    $region6: #{tpu_custom_call.1} parent=1 // pred_check
      _
    $region7: #{tpu_custom_call.1} parent=1 // pred_check_branch
      %30 = sbr.rel (0) target = $region9
    $region8: #{tpu_custom_call.1} parent=1 // pred_region
      %32 = vsyncadd [#allocation6], 0
      %s33 = sshll.u32 %s1, 4
      %s34 = int_to_ptr.hbm [resolvable:$true] %s33
      %s35 = sshll.u32 [#allocation5], 4
      %s36 = int_to_ptr.vmem [resolvable:$true] %s35
      %41 = dma.hbm_to_vmem [thread:$0]  %s34, 128, %s36, [#allocation6], 64, 64, 4
    $region9: #{tpu_custom_call.1} parent=1 // pred_fallthru
      _
    // Predicated region
    $region10: #{tpu_custom_call.1} parent=1 // pred_check
      _
    $region11: #{tpu_custom_call.1} parent=1 // pred_check_branch
      %43 = sbr.rel (0) target = $region13
    $region12: #{tpu_custom_call.1} parent=1 // pred_region
      %45 = vsyncadd [#allocation6], 0
      %s47 = sshll.u32 %s2, 4
      %s48 = int_to_ptr.hbm [resolvable:$true] %s47
      %s49 = sshll.u32 [#allocation7], 4
      %s50 = int_to_ptr.vmem [resolvable:$true] %s49
      %52 = dma.hbm_to_vmem [thread:$0]  %s48, 16, %s50, [#allocation6]
    $region13: #{tpu_custom_call.1} parent=1 // pred_fallthru
      _
    // Predicated region
    $region14: #{tpu_custom_call.1} parent=1 // pred_check
      _
    $region15: #{tpu_custom_call.1} parent=1 // pred_check_branch
      %54 = sbr.rel (0) target = $region17
    $region16: #{tpu_custom_call.1} parent=1 // pred_region
      %56 = vsyncadd [#allocation9], 0
      %s57 = sshll.u32 %s3, 4
      %s58 = int_to_ptr.hbm [resolvable:$true] %s57
      %s59 = sshll.u32 [#allocation8], 4
      %s60 = int_to_ptr.vmem [resolvable:$true] %s59
      %65 = dma.hbm_to_vmem [thread:$0]  %s58, 3072, %s60, [#allocation9], 64, 64, 4
    $region17: #{tpu_custom_call.1} parent=1 // pred_fallthru
      _
    // Predicated region
    $region18: #{tpu_custom_call.1} parent=1 // pred_check
      _
    $region19: #{tpu_custom_call.1} parent=1 // pred_check_branch
      %67 = sbr.rel (0) target = $region21
    $region20: #{tpu_custom_call.1} parent=1 // pred_region
      %69 = vsyncadd [#allocation9], 0
      %s70 = sshll.u32 %s4, 4
      %s71 = int_to_ptr.hbm [resolvable:$true] %s70
      %s72 = sshll.u32 [#allocation10], 4
      %s73 = int_to_ptr.vmem [resolvable:$true] %s72
      %78 = dma.hbm_to_vmem [thread:$0]  %s71, 384, %s73, [#allocation9], 192, 192, 12
    $region21: #{tpu_custom_call.1} parent=1 // pred_fallthru
      _
    // Predicated region
    $region22: #{tpu_custom_call.1} parent=1 // pred_check
      _
    $region23: #{tpu_custom_call.1} parent=1 // pred_check_branch
      %80 = sbr.rel (0) target = $region25
    $region24: #{tpu_custom_call.1} parent=1 // pred_region
      _
    $region25: #{tpu_custom_call.1} parent=1 // pred_fallthru
      _
    // Predicated region
    $region26: #{tpu_custom_call.1} parent=1 // pred_check
      _
    $region27: #{tpu_custom_call.1} parent=1 // pred_check_branch
      %82 = sbr.rel (0) target = $region29
    $region28: #{tpu_custom_call.1} parent=1 // pred_region
      %84 = vsyncadd [#allocation12], 0
      %s85 = sshll.u32 %s6, 4
      %s86 = int_to_ptr.hbm [resolvable:$true] %s85
      %s87 = sshll.u32 [#allocation11], 4
      %s88 = int_to_ptr.vmem [resolvable:$true] %s87
      %93 = dma.hbm_to_vmem [thread:$0]  %s86, 1024, %s88, [#allocation12], 64, 64, 4
    $region29: #{tpu_custom_call.1} parent=1 // pred_fallthru
      _
    // Predicated region
    $region30: #{tpu_custom_call.1} parent=1 // pred_check
      _
    $region31: #{tpu_custom_call.1} parent=1 // pred_check_branch
      %95 = sbr.rel (0) target = $region33
    $region32: #{tpu_custom_call.1} parent=1 // pred_region
      _
    $region33: #{tpu_custom_call.1} parent=1 // pred_fallthru
      _
    // Predicated region
    $region34: #{tpu_custom_call.1} parent=1 // pred_check
      _
    $region35: #{tpu_custom_call.1} parent=1 // pred_check_branch
      %97 = sbr.rel (0) target = $region37
    $region36: #{tpu_custom_call.1} parent=1 // pred_region
      %99 = dma.done [#allocation3], 128
    $region37: #{tpu_custom_call.1} parent=1 // pred_fallthru
      _
    // Predicated region
    $region38: #{tpu_custom_call.1} parent=1 // pred_check
      _
    $region39: #{tpu_custom_call.1} parent=1 // pred_check_branch
      %101 = sbr.rel (0) target = $region41
    $region40: #{tpu_custom_call.1} parent=1 // pred_region
      %103 = dma.done [#allocation6], 128
    $region41: #{tpu_custom_call.1} parent=1 // pred_fallthru
      _
    // Predicated region
    $region42: #{tpu_custom_call.1} parent=1 // pred_check
      _
    $region43: #{tpu_custom_call.1} parent=1 // pred_check_branch
      %105 = sbr.rel (0) target = $region45
    $region44: #{tpu_custom_call.1} parent=1 // pred_region
      %107 = dma.done [#allocation6], 16
    $region45: #{tpu_custom_call.1} parent=1 // pred_fallthru
      _
    // Predicated region
    $region46: #{tpu_custom_call.1} parent=1 // pred_check
      _
    $region47: #{tpu_custom_call.1} parent=1 // pred_check_branch
      %109 = sbr.rel (0) target = $region49
    $region48: #{tpu_custom_call.1} parent=1 // pred_region
      %111 = dma.done [#allocation9], 3072
    $region49: #{tpu_custom_call.1} parent=1 // pred_fallthru
      _
    // Predicated region
    $region50: #{tpu_custom_call.1} parent=1 // pred_check
      _
    $region51: #{tpu_custom_call.1} parent=1 // pred_check_branch
      %113 = sbr.rel (0) target = $region53
    $region52: #{tpu_custom_call.1} parent=1 // pred_region
      %115 = dma.done [#allocation9], 384
    $region53: #{tpu_custom_call.1} parent=1 // pred_fallthru
      _
    // Predicated region
    $region54: #{tpu_custom_call.1} parent=1 // pred_check
      _
    $region55: #{tpu_custom_call.1} parent=1 // pred_check_branch
      %117 = sbr.rel (0) target = $region57
    $region56: #{tpu_custom_call.1} parent=1 // pred_region
      %119 = dma.done [#allocation12], 1024
    $region57: #{tpu_custom_call.1} parent=1 // pred_fallthru
      _
    %v121 = vld [vmem:[#allocation2] sm:$0xff]
    %v122 = vpack.c.bf16 %v121, %v121
    %v123 = vld [vmem:[#allocation5] sm:$0xf]
    %v124 = vld [vmem:[#allocation5 + $0x4] sm:$0xf]
    %v125 = vld [vmem:[#allocation7] sm:$0x1]
    %v127 = vperm.slane %v125, 0
    %v131 = vunpack.c.l.b16 %v123
    %v132 = vunpack.c.l.b16 %v124
    %v133 = vpack.c.b16 %v132, %v131
    %vm135 = vcmask 130048
    %v137 = vsel %vm135, %v122, 0
    %139 = vmatpush.bf16.msra.mxu0 0
    %140 = vmatpush.bf16.msra.mxu0 0
    %141 = vmatpush.bf16.msra.mxu0 0
    %142 = vmatpush.bf16.msra.mxu0 0
    %143 = vmatpush.bf16.msra.mxu0 0
    %144 = vmatpush.bf16.msra.mxu0 0
    %145 = vmatpush.bf16.msra.mxu0 0
    %146 = vmatpush.bf16.msra.mxu0 %v133
    %147 = vmatmul.bf16.gmra.mxu0 %v137
    %v148 = vpop.f32.mrf.mxu0
    %v149 = vadd.f32 %v127, %v148
    %v150 = vpop.f32.mrf.mxu0
    %151 = vdwg.mxu0
    %v152 = vmax.f32 %v149, 0.0
    %v153 = vld [vmem:[#allocation10] sm:$0xff]
    %v154 = vld [vmem:[#allocation10 + $0x8] sm:$0xf]
    %v155 = vld [vmem:[#allocation10 + $0xc] sm:$0xff]
    %v156 = vld [vmem:[#allocation10 + $0x14] sm:$0xf]
    %v161 = vunpack.c.l.b16 %v153
    %v162 = vunpack.c.h.b16 %v153
    %v163 = vunpack.c.l.b16 %v154
    %v164 = vunpack.c.l.b16 %v155
    %v165 = vunpack.c.h.b16 %v155
    %v166 = vunpack.c.l.b16 %v156
    %v167 = vpack.c.b16 %v164, %v161
    %v168 = vpack.c.b16 %v165, %v162
    %v169 = vpack.c.b16 %v166, %v163
    %173 = vmatpush.bf16.msra.mxu0 0
    %174 = vmatpush.bf16.msra.mxu0 0
    %175 = vmatpush.bf16.msra.mxu0 0
    %176 = vmatpush.bf16.msra.mxu0 0
    %177 = vmatpush.bf16.msra.mxu0 0
    %178 = vmatpush.bf16.msra.mxu0 0
    %179 = vmatpush.bf16.msra.mxu0 0
    %180 = vmatpush.bf16.msra.mxu0 %v167
    %181 = vmatmul.bf16.gmra.mxu0 %v137
    %v182 = vpop.f32.mrf.mxu0
    %v183 = vadd.f32 0.0, %v182
    %v184 = vpop.f32.mrf.mxu0
    %185 = vdwg.mxu0
    %186 = vmatpush.bf16.msra.mxu0 0
    %187 = vmatpush.bf16.msra.mxu0 0
    %188 = vmatpush.bf16.msra.mxu0 0
    %189 = vmatpush.bf16.msra.mxu0 0
    %190 = vmatpush.bf16.msra.mxu0 0
    %191 = vmatpush.bf16.msra.mxu0 0
    %192 = vmatpush.bf16.msra.mxu0 0
    %193 = vmatpush.bf16.msra.mxu0 %v168
    %194 = vmatmul.bf16.gmra.mxu0 %v137
    %v195 = vpop.f32.mrf.mxu0
    %v196 = vadd.f32 0.0, %v195
    %v197 = vpop.f32.mrf.mxu0
    %198 = vdwg.mxu0
    %199 = vmatpush.bf16.msra.mxu0 0
    %200 = vmatpush.bf16.msra.mxu0 0
    %201 = vmatpush.bf16.msra.mxu0 0
    %202 = vmatpush.bf16.msra.mxu0 0
    %203 = vmatpush.bf16.msra.mxu0 0
    %204 = vmatpush.bf16.msra.mxu0 0
    %205 = vmatpush.bf16.msra.mxu0 0
    %206 = vmatpush.bf16.msra.mxu0 %v169
    %207 = vmatmul.bf16.gmra.mxu0 %v137
    %v208 = vpop.f32.mrf.mxu0
    %v209 = vadd.f32 0.0, %v208
    %v210 = vpop.f32.mrf.mxu0
    %211 = vdwg.mxu0
    %v212 = vld [vmem:[%s5] sm:$0x7]
    %v213 = vpack.c.bf16 %v152, %v152
    %v214 = vld [vmem:[#allocation8] sm:$0xf]
    %v215 = vld [vmem:[#allocation8 + $0x4] sm:$0xf]
    %v216 = vld [vmem:[#allocation8 + $0x8] sm:$0xf]
    %v217 = vld [vmem:[#allocation8 + $0xc] sm:$0xf]
    %v218 = vld [vmem:[#allocation8 + $0x10] sm:$0xf]
    %v219 = vld [vmem:[#allocation8 + $0x14] sm:$0xf]
    %v220 = vld [vmem:[#allocation8 + $0x18] sm:$0xf]
    %v221 = vld [vmem:[#allocation8 + $0x1c] sm:$0xf]
    %v222 = vld [vmem:[#allocation8 + $0x20] sm:$0xf]
    %v223 = vld [vmem:[#allocation8 + $0x24] sm:$0xf]
    %v224 = vld [vmem:[#allocation8 + $0x28] sm:$0xf]
    %v225 = vld [vmem:[#allocation8 + $0x2c] sm:$0xf]
    %v226 = vld [vmem:[#allocation8 + $0x30] sm:$0xf]
    %v227 = vld [vmem:[#allocation8 + $0x34] sm:$0xf]
    %v228 = vld [vmem:[#allocation8 + $0x38] sm:$0xf]
    %v229 = vld [vmem:[#allocation8 + $0x3c] sm:$0xf]
    %v246 = vunpack.c.l.b16 %v214
    %v247 = vunpack.c.l.b16 %v215
    %v248 = vunpack.c.l.b16 %v216
    %v249 = vunpack.c.l.b16 %v217
    %v250 = vunpack.c.l.b16 %v218
    %v251 = vunpack.c.l.b16 %v219
    %v252 = vunpack.c.l.b16 %v220
    %v253 = vunpack.c.l.b16 %v221
    %v254 = vunpack.c.l.b16 %v222
    %v255 = vunpack.c.l.b16 %v223
    %v256 = vunpack.c.l.b16 %v224
    %v257 = vunpack.c.l.b16 %v225
    %v258 = vunpack.c.l.b16 %v226
    %v259 = vunpack.c.l.b16 %v227
    %v260 = vunpack.c.l.b16 %v228
    %v261 = vunpack.c.l.b16 %v229
    %v262 = vpack.c.b16 %v247, %v246
    %v263 = vpack.c.b16 %v249, %v248
    %v264 = vpack.c.b16 %v251, %v250
    %v265 = vpack.c.b16 %v253, %v252
    %v266 = vpack.c.b16 %v255, %v254
    %v267 = vpack.c.b16 %v257, %v256
    %v268 = vpack.c.b16 %v259, %v258
    %v269 = vpack.c.b16 %v261, %v260
    %278 = vmatpush.bf16.msra.mxu0 %v269
    %279 = vmatpush.bf16.msra.mxu0 %v268
    %280 = vmatpush.bf16.msra.mxu0 %v267
    %281 = vmatpush.bf16.msra.mxu0 %v266
    %282 = vmatpush.bf16.msra.mxu0 %v265
    %283 = vmatpush.bf16.msra.mxu0 %v264
    %284 = vmatpush.bf16.msra.mxu0 %v263
    %285 = vmatpush.bf16.msra.mxu0 %v262
    %286 = vmatmul.bf16.gmra.mxu0 %v213
    %v287 = vpop.f32.mrf.mxu0
    %v288 = vadd.f32 %v183, %v287
    %v289 = vpop.f32.mrf.mxu0
    %290 = vdwg.mxu0
    %v291 = vperm.slane %v212, 0
    %v292 = vadd.f32 %v288, %v291
    %v293 = vmax.f32 %v292, 0.0
    %v294 = vpack.c.bf16 %v293, %v293
    %s295 = scalar_lea.vmem [#allocation8], 64
    %v296 = vld [vmem:[%s295] sm:$0xf]
    %v297 = vld [vmem:[%s295 + $0x4] sm:$0xf]
    %v298 = vld [vmem:[%s295 + $0x8] sm:$0xf]
    %v299 = vld [vmem:[%s295 + $0xc] sm:$0xf]
    %v300 = vld [vmem:[%s295 + $0x10] sm:$0xf]
    %v301 = vld [vmem:[%s295 + $0x14] sm:$0xf]
    %v302 = vld [vmem:[%s295 + $0x18] sm:$0xf]
    %v303 = vld [vmem:[%s295 + $0x1c] sm:$0xf]
    %v304 = vld [vmem:[%s295 + $0x20] sm:$0xf]
    %v305 = vld [vmem:[%s295 + $0x24] sm:$0xf]
    %v306 = vld [vmem:[%s295 + $0x28] sm:$0xf]
    %v307 = vld [vmem:[%s295 + $0x2c] sm:$0xf]
    %v308 = vld [vmem:[%s295 + $0x30] sm:$0xf]
    %v309 = vld [vmem:[%s295 + $0x34] sm:$0xf]
    %v310 = vld [vmem:[%s295 + $0x38] sm:$0xf]
    %v311 = vld [vmem:[%s295 + $0x3c] sm:$0xf]
    %v328 = vunpack.c.l.b16 %v296
    %v329 = vunpack.c.l.b16 %v297
    %v330 = vunpack.c.l.b16 %v298
    %v331 = vunpack.c.l.b16 %v299
    %v332 = vunpack.c.l.b16 %v300
    %v333 = vunpack.c.l.b16 %v301
    %v334 = vunpack.c.l.b16 %v302
    %v335 = vunpack.c.l.b16 %v303
    %v336 = vunpack.c.l.b16 %v304
    %v337 = vunpack.c.l.b16 %v305
    %v338 = vunpack.c.l.b16 %v306
    %v339 = vunpack.c.l.b16 %v307
    %v340 = vunpack.c.l.b16 %v308
    %v341 = vunpack.c.l.b16 %v309
    %v342 = vunpack.c.l.b16 %v310
    %v343 = vunpack.c.l.b16 %v311
    %v344 = vpack.c.b16 %v329, %v328
    %v345 = vpack.c.b16 %v331, %v330
    %v346 = vpack.c.b16 %v333, %v332
    %v347 = vpack.c.b16 %v335, %v334
    %v348 = vpack.c.b16 %v337, %v336
    %v349 = vpack.c.b16 %v339, %v338
    %v350 = vpack.c.b16 %v341, %v340
    %v351 = vpack.c.b16 %v343, %v342
    %360 = vmatpush.bf16.msra.mxu0 %v351
    %361 = vmatpush.bf16.msra.mxu0 %v350
    %362 = vmatpush.bf16.msra.mxu0 %v349
    %363 = vmatpush.bf16.msra.mxu0 %v348
    %364 = vmatpush.bf16.msra.mxu0 %v347
    %365 = vmatpush.bf16.msra.mxu0 %v346
    %366 = vmatpush.bf16.msra.mxu0 %v345
    %367 = vmatpush.bf16.msra.mxu0 %v344
    %368 = vmatmul.bf16.gmra.mxu0 %v294
    %v369 = vpop.f32.mrf.mxu0
    %v370 = vadd.f32 %v196, %v369
    %v371 = vpop.f32.mrf.mxu0
    %372 = vdwg.mxu0
    %v373 = vperm.slane %v212, 1
    %v374 = vadd.f32 %v370, %v373
    %v375 = vmax.f32 %v374, 0.0
    %v376 = vpack.c.bf16 %v375, %v375
    %s377 = scalar_lea.vmem [#allocation8], 128
    %v378 = vld [vmem:[%s377] sm:$0xf]
    %v379 = vld [vmem:[%s377 + $0x4] sm:$0xf]
    %v380 = vld [vmem:[%s377 + $0x8] sm:$0xf]
    %v381 = vld [vmem:[%s377 + $0xc] sm:$0xf]
    %v382 = vld [vmem:[%s377 + $0x10] sm:$0xf]
    %v383 = vld [vmem:[%s377 + $0x14] sm:$0xf]
    %v384 = vld [vmem:[%s377 + $0x18] sm:$0xf]
    %v385 = vld [vmem:[%s377 + $0x1c] sm:$0xf]
    %v386 = vld [vmem:[%s377 + $0x20] sm:$0xf]
    %v387 = vld [vmem:[%s377 + $0x24] sm:$0xf]
    %v388 = vld [vmem:[%s377 + $0x28] sm:$0xf]
    %v389 = vld [vmem:[%s377 + $0x2c] sm:$0xf]
    %v390 = vld [vmem:[%s377 + $0x30] sm:$0xf]
    %v391 = vld [vmem:[%s377 + $0x34] sm:$0xf]
    %v392 = vld [vmem:[%s377 + $0x38] sm:$0xf]
    %v393 = vld [vmem:[%s377 + $0x3c] sm:$0xf]
    %v410 = vunpack.c.l.b16 %v378
    %v411 = vunpack.c.l.b16 %v379
    %v412 = vunpack.c.l.b16 %v380
    %v413 = vunpack.c.l.b16 %v381
    %v414 = vunpack.c.l.b16 %v382
    %v415 = vunpack.c.l.b16 %v383
    %v416 = vunpack.c.l.b16 %v384
    %v417 = vunpack.c.l.b16 %v385
    %v418 = vunpack.c.l.b16 %v386
    %v419 = vunpack.c.l.b16 %v387
    %v420 = vunpack.c.l.b16 %v388
    %v421 = vunpack.c.l.b16 %v389
    %v422 = vunpack.c.l.b16 %v390
    %v423 = vunpack.c.l.b16 %v391
    %v424 = vunpack.c.l.b16 %v392
    %v425 = vunpack.c.l.b16 %v393
    %v426 = vpack.c.b16 %v411, %v410
    %v427 = vpack.c.b16 %v413, %v412
    %v428 = vpack.c.b16 %v415, %v414
    %v429 = vpack.c.b16 %v417, %v416
    %v430 = vpack.c.b16 %v419, %v418
    %v431 = vpack.c.b16 %v421, %v420
    %v432 = vpack.c.b16 %v423, %v422
    %v433 = vpack.c.b16 %v425, %v424
    %442 = vmatpush.bf16.msra.mxu0 %v433
    %443 = vmatpush.bf16.msra.mxu0 %v432
    %444 = vmatpush.bf16.msra.mxu0 %v431
    %445 = vmatpush.bf16.msra.mxu0 %v430
    %446 = vmatpush.bf16.msra.mxu0 %v429
    %447 = vmatpush.bf16.msra.mxu0 %v428
    %448 = vmatpush.bf16.msra.mxu0 %v427
    %449 = vmatpush.bf16.msra.mxu0 %v426
    %450 = vmatmul.bf16.gmra.mxu0 %v376
    %v451 = vpop.f32.mrf.mxu0
    %v452 = vadd.f32 %v209, %v451
    %v453 = vpop.f32.mrf.mxu0
    %454 = vdwg.mxu0
    %v455 = vperm.slane %v212, 2
    %v456 = vadd.f32 %v452, %v455
    %v457 = vmax.f32 %v456, 0.0
    %v458 = vpack.c.bf16 %v457, %v457
    %v459 = vld [vmem:[#allocation11] sm:$0xf]
    %v460 = vld [vmem:[#allocation11 + $0x4] sm:$0xf]
    %v461 = vld [vmem:[#allocation11 + $0x8] sm:$0xf]
    %v462 = vld [vmem:[#allocation11 + $0xc] sm:$0xf]
    %v463 = vld [vmem:[#allocation11 + $0x10] sm:$0xf]
    %v464 = vld [vmem:[#allocation11 + $0x14] sm:$0xf]
    %v465 = vld [vmem:[#allocation11 + $0x18] sm:$0xf]
    %v466 = vld [vmem:[#allocation11 + $0x1c] sm:$0xf]
    %v467 = vld [vmem:[#allocation11 + $0x20] sm:$0xf]
    %v468 = vld [vmem:[#allocation11 + $0x24] sm:$0xf]
    %v469 = vld [vmem:[#allocation11 + $0x28] sm:$0xf]
    %v470 = vld [vmem:[#allocation11 + $0x2c] sm:$0xf]
    %v471 = vld [vmem:[#allocation11 + $0x30] sm:$0xf]
    %v472 = vld [vmem:[#allocation11 + $0x34] sm:$0xf]
    %v473 = vld [vmem:[#allocation11 + $0x38] sm:$0xf]
    %v474 = vld [vmem:[#allocation11 + $0x3c] sm:$0xf]
    %v475 = vld [vmem:[%s7] sm:$0x1]
    %v477 = vperm.slane %v475, 0
    %v495 = vunpack.c.l.b16 %v459
    %v496 = vunpack.c.l.b16 %v460
    %v497 = vunpack.c.l.b16 %v461
    %v498 = vunpack.c.l.b16 %v462
    %v499 = vunpack.c.l.b16 %v463
    %v500 = vunpack.c.l.b16 %v464
    %v501 = vunpack.c.l.b16 %v465
    %v502 = vunpack.c.l.b16 %v466
    %v503 = vunpack.c.l.b16 %v467
    %v504 = vunpack.c.l.b16 %v468
    %v505 = vunpack.c.l.b16 %v469
    %v506 = vunpack.c.l.b16 %v470
    %v507 = vunpack.c.l.b16 %v471
    %v508 = vunpack.c.l.b16 %v472
    %v509 = vunpack.c.l.b16 %v473
    %v510 = vunpack.c.l.b16 %v474
    %v511 = vpack.c.b16 %v496, %v495
    %v512 = vpack.c.b16 %v498, %v497
    %v513 = vpack.c.b16 %v500, %v499
    %v514 = vpack.c.b16 %v502, %v501
    %v515 = vpack.c.b16 %v504, %v503
    %v516 = vpack.c.b16 %v506, %v505
    %v517 = vpack.c.b16 %v508, %v507
    %v518 = vpack.c.b16 %v510, %v509
    %527 = vmatpush.bf16.msra.mxu0 %v518
    %528 = vmatpush.bf16.msra.mxu0 %v517
    %529 = vmatpush.bf16.msra.mxu0 %v516
    %530 = vmatpush.bf16.msra.mxu0 %v515
    %531 = vmatpush.bf16.msra.mxu0 %v514
    %532 = vmatpush.bf16.msra.mxu0 %v513
    %533 = vmatpush.bf16.msra.mxu0 %v512
    %534 = vmatpush.bf16.msra.mxu0 %v511
    %535 = vmatmul.bf16.gmra.mxu0 %v458
    %v536 = vpop.f32.mrf.mxu0
    %v537 = vadd.f32 %v477, %v536
    %v538 = vpop.f32.mrf.mxu0
    %539 = vdwg.mxu0
    %540 = vst [vmem:[#allocation13] sm:$0xff] %v537
    // Predicated region
    $region58: #{tpu_custom_call.1} parent=1 // pred_check
      _
    $region59: #{tpu_custom_call.1} parent=1 // pred_check_branch
      %542 = sbr.rel (0) target = $region61
    $region60: #{tpu_custom_call.1} parent=1 // pred_region
      %544 = vsyncadd [#allocation4], 0
      %s546 = sshll.u32 [#allocation13], 4
      %s547 = int_to_ptr.vmem [resolvable:$true] %s546
      %s548 = sshll.u32 %s8, 4
      %s549 = int_to_ptr.hbm [resolvable:$true] %s548
      %551 = dma.vmem_to_hbm [thread:$0]  %s547, 128, %s549, [#allocation4]
    $region61: #{tpu_custom_call.1} parent=1 // pred_fallthru
      _
    // Predicated region
    $region62: #{tpu_custom_call.1} parent=1 // pred_check
      _
    $region63: #{tpu_custom_call.1} parent=1 // pred_check_branch
      %553 = sbr.rel (0) target = $region65
    $region64: #{tpu_custom_call.1} parent=1 // pred_region
      %555 = dma.done [#allocation4], 128
    $region65: #{tpu_custom_call.1} parent=1 // pred_fallthru
      _
    %556 = vsyncpa [#allocation3], 1
    %557 = vsyncpa [#allocation6], 1
    %558 = vsyncpa [#allocation9], 1
    %559 = vsyncpa [#allocation12], 1
    %560 = vsyncpa [#allocation4], 1

</llo_original>
